<compile_context>
chip_gen: v5e
topology: v5e:2x2
jax: 0.10.0
libtpu: 0.0.40
codegen_flags: <defaults>
</compile_context>

<pallas_src>
import functools

import jax
import jax.numpy as jnp
from jax.experimental import pallas as pl
from jax.experimental.pallas import tpu as pltpu


def _vmem_limit(footprint_bytes):
    # Declare the scoped-VMEM need explicitly (v5e default is only 16 MiB) but
    # clamp to a range that is safe on every generation (v7x has 64 MiB total).
    return int(min(32 * 1024 * 1024,
                   max(8 * 1024 * 1024, footprint_bytes + 2 * 1024 * 1024)))


# ----------------------- fused path (whole rows fit in VMEM) -----------------------

def _fused_kernel(x_ref, w1t_ref, w2t_ref, scale_ref, o_ref):
    # x_ref: (bb, C, N) VMEM; w1t_ref: (C, H); w2t_ref: (H, C); scale_ref: (1,) SMEM.
    # Pool over N. Upcast only inside the reductions; the max is exact in the
    # input dtype and upcast afterwards on the small (bb, C) result — no
    # long-lived full-block f32 temp.
    pool = (jnp.mean(x_ref[...].astype(jnp.float32), axis=-1)
            + jnp.max(x_ref[...], axis=-1).astype(jnp.float32))        # (bb, C)

    # Squeeze-excite FC, batched over the whole block (two tiny MXU matmuls,
    # default precision — sigmoid saturation makes HIGHEST irrelevant here).
    h = jnp.maximum(jnp.dot(pool, w1t_ref[...],
                            preferred_element_type=jnp.float32), 0.0)   # (bb, H)
    att = jnp.dot(h, w2t_ref[...], preferred_element_type=jnp.float32)  # (bb, C)
    # Fold the learnable scale into the small (bb, C) vector, then drop to the
    # I/O dtype so the big elementwise multiply runs natively (bf16 on v6e/v7x).
    att = (jax.nn.sigmoid(att) * scale_ref[0]).astype(x_ref.dtype)

    # Lane-dense epilogue: one multiply per element, re-reading the resident
    # VMEM block (the extra vld has huge slack in this mem-bound kernel).
    o_ref[...] = x_ref[...] * att[:, :, None]


# --------------------------- N-tiled fallback (large N) ----------------------------

def _pool_att_kernel(x_ref, w1t_ref, w2t_ref, scale_ref, att_ref,
                     sum_sc, max_sc, *, n_total):
    # Pass 1: accumulate sum/max pooling over N tiles, FC on the last tile.
    k = pl.program_id(1)

    @pl.when(k == 0)
    def _():
        sum_sc[...] = jnp.zeros_like(sum_sc)
        max_sc[...] = jnp.full_like(max_sc, -jnp.inf)

    bb, c, bn = x_ref.shape
    col = k * bn + jax.lax.broadcasted_iota(jnp.int32, (bb, c, bn), 2)
    valid = col < n_total                                   # mask ragged last tile
    xf = x_ref[...].astype(jnp.float32)
    sum_sc[...] = sum_sc[...] + jnp.sum(jnp.where(valid, xf, 0.0), axis=-1)
    max_sc[...] = jnp.maximum(
        max_sc[...], jnp.max(jnp.where(valid, xf, -jnp.inf), axis=-1))

    @pl.when(k == pl.num_programs(1) - 1)
    def _():
        pool = sum_sc[...] * (1.0 / n_total) + max_sc[...]               # (bb, C)
        h = jnp.maximum(jnp.dot(pool, w1t_ref[...],
                                preferred_element_type=jnp.float32), 0.0)
        att = jnp.dot(h, w2t_ref[...], preferred_element_type=jnp.float32)
        att = jax.nn.sigmoid(att) * scale_ref[0]
        att_ref[...] = att[:, None, :]                                   # (bb, 1, C)


def _apply_att_kernel(att_ref, x_ref, o_ref):
    # Pass 2: lane-dense elementwise epilogue on (bb, C, bn) tiles.
    bb, c, bn = x_ref.shape
    a = att_ref[...].reshape(bb, c).astype(x_ref.dtype)                  # (bb, C)
    o_ref[...] = x_ref[...] * a[:, :, None]


# ------------------------------------ wrapper --------------------------------------

def channel_chuli(x, w1, w2, scale, *, vmem_block_budget_bytes=8 * 1024 * 1024):
    """ChannelChuLi forward. x: (B, C, N); w1: (H, C); w2: (C, H); scale: (1,)."""
    B, C, N = x.shape
    H = w1.shape[0]
    w1t = jnp.transpose(w1)          # (C, H)
    w2t = jnp.transpose(w2)          # (H, C)
    scale = scale.astype(jnp.float32)

    itemsize = x.dtype.itemsize
    row_bytes = C * N * itemsize
    weight_bytes = 2 * (C * H * 4) * 2          # two weight blocks, double-buffered

    if 4 * row_bytes <= vmem_block_budget_bytes:
        # ---- fused single-pass kernel: whole (block_b, C, N) rows resident ----
        block_b = int(max(1, min(B, vmem_block_budget_bytes // (4 * row_bytes))))
        # Keep >= 2 programs on the parallel batch axis whenever B >= 2 so
        # v7x's two TensorCores both get work (one sample per core at B=2).
        block_b = int(max(1, min(block_b, pl.cdiv(B, 2))))
        grid = (pl.cdiv(B, block_b),)
        footprint = 4 * block_b * row_bytes + weight_bytes
        return pl.pallas_call(
            _fused_kernel,
            out_shape=jax.ShapeDtypeStruct((B, C, N), x.dtype),
            grid=grid,
            in_specs=[
                pl.BlockSpec((block_b, C, N), lambda b: (b, 0, 0)),
                pl.BlockSpec((C, H), lambda b: (0, 0)),
                pl.BlockSpec((H, C), lambda b: (0, 0)),
                pl.BlockSpec(memory_space=pltpu.MemorySpace.SMEM),
            ],
            out_specs=pl.BlockSpec((block_b, C, N), lambda b: (b, 0, 0)),
            compiler_params=pltpu.CompilerParams(
                dimension_semantics=("parallel",),
                vmem_limit_bytes=_vmem_limit(footprint)),
        )(x, w1t, w2t, scale)

    # ---- N-tiled fallback: a single (1, C, N) row would blow scoped VMEM ----
    # NOTE: if production N is not a multiple of 128, a (B, N, C) layout (C=256
    # as the lane dim) would keep stores unmasked; not needed at the TIF shapes.
    block_b = 1
    block_n = (vmem_block_budget_bytes // (4 * C * itemsize)) // 128 * 128
    block_n = int(max(128, min(block_n, pl.cdiv(N, 128) * 128)))
    nb_b = pl.cdiv(B, block_b)
    nb_n = pl.cdiv(N, block_n)
    tile_bytes = block_b * C * block_n * itemsize

    # Pass 1: pooled sum/max over N tiles, FC -> att of shape (B, 1, C).
    pool_footprint = (3 * block_b * C * block_n * 4 + weight_bytes
                      + 4 * block_b * C * 4)
    att = pl.pallas_call(
        functools.partial(_pool_att_kernel, n_total=N),
        out_shape=jax.ShapeDtypeStruct((B, 1, C), jnp.float32),
        grid=(nb_b, nb_n),
        in_specs=[
            pl.BlockSpec((block_b, C, block_n), lambda b, k: (b, 0, k)),
            pl.BlockSpec((C, H), lambda b, k: (0, 0)),
            pl.BlockSpec((H, C), lambda b, k: (0, 0)),
            pl.BlockSpec(memory_space=pltpu.MemorySpace.SMEM),
        ],
        out_specs=pl.BlockSpec((block_b, 1, C), lambda b, k: (b, 0, 0)),
        scratch_shapes=[pltpu.VMEM((block_b, C), jnp.float32),
                        pltpu.VMEM((block_b, C), jnp.float32)],
        compiler_params=pltpu.CompilerParams(
            dimension_semantics=("parallel", "arbitrary"),
            vmem_limit_bytes=_vmem_limit(pool_footprint)),
    )(x, w1t, w2t, scale)

    # Pass 2: lane-dense elementwise epilogue tiled over (B, N).
    apply_footprint = 4 * tile_bytes + 2 * block_b * C * 4
    return pl.pallas_call(
        _apply_att_kernel,
        out_shape=jax.ShapeDtypeStruct((B, C, N), x.dtype),
        grid=(nb_b, nb_n),
        in_specs=[
            pl.BlockSpec((block_b, 1, C), lambda b, n: (b, 0, 0)),
            pl.BlockSpec((block_b, C, block_n), lambda b, n: (b, 0, n)),
        ],
        out_specs=pl.BlockSpec((block_b, C, block_n), lambda b, n: (b, 0, n)),
        compiler_params=pltpu.CompilerParams(
            dimension_semantics=("parallel", "parallel"),
            vmem_limit_bytes=_vmem_limit(apply_footprint)),
    )(att, x)


def channel_chuli_ref(x, w1, w2, scale):
    xf = x.astype(jnp.float32)
    pool = jnp.mean(xf, axis=-1) + jnp.max(xf, axis=-1)                    # (B, C)
    h = jnp.maximum(jnp.dot(pool, w1.T.astype(jnp.float32),
                            preferred_element_type=jnp.float32), 0.0)      # (B, H)
    att = jax.nn.sigmoid(jnp.dot(h, w2.T.astype(jnp.float32),
                                 preferred_element_type=jnp.float32))      # (B, C)
    return (xf * (att * scale[0])[:, :, None]).astype(x.dtype)


if __name__ == "__main__":
    # ChannelChuLi(256) as used inside TIF: C=256, ratio=16 -> hidden H=16.
    # N = 128 keeps the store lane-dense; B=2 matches FeatureStorage(max_features=2).
    B, C, N = 2, 256, 128
    ratio = 16
    H = C // ratio                                                         # 16

    key = jax.random.PRNGKey(0)
    kx, k1, k2, kx2 = jax.random.split(key, 4)

    x = jax.random.normal(kx, (B, C, N), dtype=jnp.float32)
    # Deterministic Kaiming-like init for the two bias-free 1x1-conv weights.
    w1 = jax.random.normal(k1, (H, C), dtype=jnp.float32) * (2.0 / C) ** 0.5
    w2 = jax.random.normal(k2, (C, H), dtype=jnp.float32) * (2.0 / H) ** 0.5
    # NOTE: the PyTorch module initializes scale = zeros(1) (all-zero output);
    # use a non-zero value so the test exercises the full data path.
    scale = jnp.array([0.5], dtype=jnp.float32)

    # Fused path (the real TIF operating point).
    out = jax.block_until_ready(channel_chuli(x, w1, w2, scale))
    ref = channel_chuli_ref(x, w1, w2, scale)
    assert out.shape == (B, C, N)
    assert jnp.allclose(out, ref, atol=2e-3, rtol=2e-3), "fused path mismatch"

    # N-tiled fallback path (forced via a tiny VMEM block budget).
    N2 = 384
    x2 = jax.random.normal(kx2, (B, C, N2), dtype=jnp.float32)
    out2 = jax.block_until_ready(
        channel_chuli(x2, w1, w2, scale, vmem_block_budget_bytes=256 * 1024))
    ref2 = channel_chuli_ref(x2, w1, w2, scale)
    assert out2.shape == (B, C, N2)
    assert jnp.allclose(out2, ref2, atol=2e-3, rtol=2e-3), "tiled path mismatch"

    print("KERNEL_OK")
</pallas_src>

<mosaic_0001>
module attributes {stable_mosaic.version = 11 : i64} {
  func.func @_fused_kernel(%arg0: i32, %arg1: memref<1x256x128xf32, #tpu.memory_space<vmem>>, %arg2: memref<256x16xf32, #tpu.memory_space<vmem>>, %arg3: memref<16x256xf32, #tpu.memory_space<vmem>>, %arg4: memref<1xf32, #tpu.memory_space<smem>>, %arg5: memref<1x256x128xf32, #tpu.memory_space<vmem>>) attributes {dimension_semantics = [#tpu.dimension_semantics<parallel>], iteration_bounds = array<i64: 2>, scalar_prefetch = 0 : i64, scratch_operands = 0 : i64, tpu.core_type = #tpu.core_type<tc>, window_params = [{transform_indices = @transform_0, window_bounds = array<i64: 1, 256, 128>}, {pipeline_mode = #tpu.pipeline_mode<synchronous>, transform_indices = @transform_1, window_bounds = array<i64: 256, 16>}, {pipeline_mode = #tpu.pipeline_mode<synchronous>, transform_indices = @transform_2, window_bounds = array<i64: 16, 256>}, {transform_indices = @transform_3, window_bounds = array<i64: 1>}, {transform_indices = @transform_4, window_bounds = array<i64: 1, 256, 128>}]} {
    %c0 = arith.constant 0 : index
    %c0_0 = arith.constant 0 : index
    %c0_1 = arith.constant 0 : index
    %0 = vector.load %arg1[%c0, %c0_0, %c0_1] : memref<1x256x128xf32, #tpu.memory_space<vmem>>, vector<1x256x128xf32>
    %cst = arith.constant dense<0.000000e+00> : vector<1x256xf32>
    %1 = vector.multi_reduction <add>, %0, %cst [2] : vector<1x256x128xf32> to vector<1x256xf32>
    %cst_2 = arith.constant 1.280000e+02 : f32
    %2 = vector.broadcast %cst_2 : f32 to vector<1x256xf32>
    %3 = arith.divf %1, %2 : vector<1x256xf32>
    %c0_3 = arith.constant 0 : index
    %c0_4 = arith.constant 0 : index
    %c0_5 = arith.constant 0 : index
    %4 = vector.load %arg1[%c0_3, %c0_4, %c0_5] : memref<1x256x128xf32, #tpu.memory_space<vmem>>, vector<1x256x128xf32>
    %cst_6 = arith.constant dense<0xFF800000> : vector<1x256xf32>
    %5 = vector.multi_reduction <maximumf>, %4, %cst_6 [2] : vector<1x256x128xf32> to vector<1x256xf32>
    %6 = arith.addf %3, %5 : vector<1x256xf32>
    %c0_7 = arith.constant 0 : index
    %c0_8 = arith.constant 0 : index
    %7 = vector.load %arg2[%c0_7, %c0_8] : memref<256x16xf32, #tpu.memory_space<vmem>>, vector<256x16xf32>
    %cst_9 = arith.constant dense<0.000000e+00> : vector<1x16xf32>
    %8 = tpu.matmul %6, %7, %cst_9 {dimension_numbers = #tpu.dot_dimension_numbers<[1], [0], [0], [1], [0, 0, 1, 1], [], []>} : vector<1x256xf32>, vector<256x16xf32>, vector<1x16xf32> -> vector<1x16xf32>
    %cst_10 = arith.constant 0.000000e+00 : f32
    %9 = vector.broadcast %cst_10 : f32 to vector<1x16xf32>
    %10 = arith.maximumf %8, %9 : vector<1x16xf32>
    %c0_11 = arith.constant 0 : index
    %c0_12 = arith.constant 0 : index
    %11 = vector.load %arg3[%c0_11, %c0_12] : memref<16x256xf32, #tpu.memory_space<vmem>>, vector<16x256xf32>
    %cst_13 = arith.constant dense<0.000000e+00> : vector<1x256xf32>
    %12 = tpu.matmul %10, %11, %cst_13 {dimension_numbers = #tpu.dot_dimension_numbers<[1], [0], [0], [1], [0, 0, 1, 1], [], []>} : vector<1x16xf32>, vector<16x256xf32>, vector<1x256xf32> -> vector<1x256xf32>
    %13 = arith.negf %12 : vector<1x256xf32>
    %14 = math.exp %13 : vector<1x256xf32>
    %cst_14 = arith.constant 1.000000e+00 : f32
    %15 = vector.broadcast %cst_14 : f32 to vector<1x256xf32>
    %16 = arith.addf %15, %14 : vector<1x256xf32>
    %17 = arith.divf %15, %16 : vector<1x256xf32>
    %c0_15 = arith.constant 0 : index
    %18 = memref.load %arg4[%c0_15] : memref<1xf32, #tpu.memory_space<smem>>
    %19 = vector.broadcast %18 : f32 to vector<1x256xf32>
    %20 = arith.mulf %17, %19 : vector<1x256xf32>
    %c0_16 = arith.constant 0 : index
    %c0_17 = arith.constant 0 : index
    %c0_18 = arith.constant 0 : index
    %21 = vector.load %arg1[%c0_16, %c0_17, %c0_18] : memref<1x256x128xf32, #tpu.memory_space<vmem>>, vector<1x256x128xf32>
    %22 = vector.shape_cast %20 : vector<1x256xf32> to vector<1x256x1xf32>
    %23 = vector.broadcast %22 : vector<1x256x1xf32> to vector<1x256x128xf32>
    %24 = arith.mulf %21, %23 : vector<1x256x128xf32>
    %c0_19 = arith.constant 0 : index
    %c0_20 = arith.constant 0 : index
    %c0_21 = arith.constant 0 : index
    %25 = vector.load %arg5[%c0_19, %c0_20, %c0_21] : memref<1x256x128xf32, #tpu.memory_space<vmem>>, vector<1x256x128xf32>
    tpu.vector_store %arg5[%c0_19, %c0_20, %c0_21], %24 {strides = array<i32>} : memref<1x256x128xf32, #tpu.memory_space<vmem>>, vector<1x256x128xf32>,
    return
  }
  func.func @transform_0(%arg0: i32) -> (i32, i32, i32) {
    %c0_i32 = arith.constant 0 : i32
    %c0_i32_0 = arith.constant 0 : i32
    %c0_i32_1 = arith.constant 0 : i32
    return %arg0, %c0_i32, %c0_i32_0 : i32, i32, i32
  }
  func.func @transform_1(%arg0: i32) -> (i32, i32) {
    %c0_i32 = arith.constant 0 : i32
    %c0_i32_0 = arith.constant 0 : i32
    %c0_i32_1 = arith.constant 0 : i32
    return %c0_i32, %c0_i32_0 : i32, i32
  }
  func.func @transform_2(%arg0: i32) -> (i32, i32) {
    %c0_i32 = arith.constant 0 : i32
    %c0_i32_0 = arith.constant 0 : i32
    %c0_i32_1 = arith.constant 0 : i32
    return %c0_i32, %c0_i32_0 : i32, i32
  }
  func.func @transform_3(%arg0: i32) -> i32 {
    %c0_i32 = arith.constant 0 : i32
    %c0_i32_0 = arith.constant 0 : i32
    return %c0_i32 : i32
  }
  func.func @transform_4(%arg0: i32) -> (i32, i32, i32) {
    %c0_i32 = arith.constant 0 : i32
    %c0_i32_0 = arith.constant 0 : i32
    %c0_i32_1 = arith.constant 0 : i32
    return %arg0, %c0_i32, %c0_i32_0 : i32, i32, i32
  }
}

</mosaic_0001>

<llo_original>
// kernel: tpu_custom_call.1
$region0: #{tpu_custom_call.1}
  #allocation0 [shape = 'u32[]', space=smem, size = 0x4, offset = 0x4, fixed_abs, tag = 'smem constant byte address 0x4 - core index']
  #allocation1 [shape = 'u32[72,128]{1,0:T(1,128)}', space=vmem, size = 0x9000, scoped, tag = 'internal scratch']
  #allocation2 [shape = 'f32[1]{0:T(128)S(6)}', space=smem, size = 0x200, scoped, tag = 'scoped memory for tpu_custom_call.1']
  %s0 = inlined_call_operand.hbm [shape: f32[2,256,128], index: 0, kind: input, shape index: {}]
  %s1 = inlined_call_operand.vmem [shape: f32[256,16], index: 1, kind: input, shape index: {}]
  %s2 = inlined_call_operand.vmem [shape: f32[16,256], index: 2, kind: input, shape index: {}]
  %s3 = inlined_call_operand.<no memory space> [shape: f32[1], index: 3, kind: input, shape index: {}]
  %s4 = inlined_call_operand.hbm [shape: f32[2,256,128], index: 4, kind: output, shape index: {}]
  %s5 = sld [smem:[#allocation0]]
  $region53: #{tpu_custom_call.1} parent=0
    _
  %s7 = ssub.s32 1, %s5
  %s8 = scalar_select 0, %s7, %s5
  %9 = sst [smem:[#allocation2]] %s3
  $region1: #{tpu_custom_call.1} parent=0
    #allocation3 [shape = 'u8[262144]{0}', space=vmem, size = 0x40000, scoped, tag = 'input window, operand 0']
    #allocation4 [shape = 's32[2]{0}', space=sflag, size = 0x8, scoped, tag = 'scoped memory for tpu_custom_call.1']
    #allocation5 [shape = 's32[2]{0}', space=sflag, size = 0x8, scoped, tag = 'scoped memory for tpu_custom_call.1']
    #allocation6 [shape = 'u8[262144]{0}', space=vmem, size = 0x40000, scoped, tag = 'output window, operand 0']
    %10 = vsyncpa [#allocation4], 0
    %s11 = scalar_lea.sflag [#allocation4], 1
    %12 = vsyncpa %s11, 0
    %13 = vsyncpa [#allocation5], 0
    %s14 = scalar_lea.sflag [#allocation5], 1
    %15 = vsyncpa %s14, 0
    loop: start=0, step=1, limit=4
    $region2: #{tpu_custom_call.1} parent=1 // loop_pre_header
      _
    $region3: #{tpu_custom_call.1} parent=1 // loop_header
      %s17 = sphi 0, %s21
      %p18 = scmp.ge.s32.totalorder %s17, 4
      %s27 = sphi 0, %s29
      %s30 = sphi 0, %s27
      %s31 = sphi 0, %s30
      %s47 = sphi 0, %s31
      %s51 = sphi 0, %s51
      %s53 = sphi 0, %s51
      %s54 = sphi 0, %s53
      %s68 = sphi 0, %s54
      %s72 = sphi 0, %s72
      %s74 = sphi 0, %s72
      %s75 = sphi 0, %s74
      %s89 = sphi 0, %s75
      %s93 = sphi 0, %s93
      %s95 = sphi 0, %s93
      %s96 = sphi 0, %s95
      %s110 = sphi 0, %s96
      %s116 = sphi 0, %s118
      %s119 = sphi 0, %s116
      %s120 = sphi 0, %s119
      %s136 = sphi 0, %s120
    $region4: #{tpu_custom_call.1} parent=1 // loop_header_branch
      %20 = sbr.rel (%p18) target = $region8
    $region5: #{tpu_custom_call.1} parent=1 // loop_body
      %s22 = ssub.s32 %s17, 1
      %s23 = ssub.s32 %s17, 2
      %s24 = sadd.s32 %s17, 1
      %s25 = ssub.s32 %s17, %s24
      %p26 = scmp.eq.s32.totalorder %s25, 0
      %s28 = sadd.s32 %s27, 1
      %s29 = scalar_select %p26, %s27, %s28
      %p32 = pneg %p26
      %p33 = scmp.eq.s32.totalorder %s17, 1
      %p34 = por %p32, %p33
      %p35 = scmp.ne.s32.totalorder %s27, %s30
      %p36 = scmp.eq.s32.totalorder %s17, 0
      %p37 = por %p35, %p36
      %p38 = scmp.ne.s32.totalorder %s27, %s30
      %p39 = scmp.eq.s32.totalorder %s22, 1
      %p40 = por %p38, %p39
      %p41 = scmp.ne.s32.totalorder %s30, %s31
      %p42 = scmp.eq.s32.totalorder %s22, 0
      %p43 = por %p41, %p42
      %p44 = scmp.ne.s32.totalorder %s30, %s31
      %p45 = scmp.eq.s32.totalorder %s23, 1
      %p46 = por %p44, %p45
      %p48 = scmp.ne.s32.totalorder %s31, %s47
      %p49 = scmp.eq.s32.totalorder %s23, 0
      %p50 = por %p48, %p49
      %s52 = sadd.s32 %s51, 1
      %p55 = scmp.eq.s32.totalorder %s17, 1
      %p56 = scmp.ne.s32.totalorder %s51, %s53
      %p57 = scmp.eq.s32.totalorder %s17, 0
      %p58 = por %p56, %p57
      %p59 = scmp.ne.s32.totalorder %s51, %s53
      %p60 = scmp.eq.s32.totalorder %s22, 1
      %p61 = por %p59, %p60
      %p62 = scmp.ne.s32.totalorder %s53, %s54
      %p63 = scmp.eq.s32.totalorder %s22, 0
      %p64 = por %p62, %p63
      %p65 = scmp.ne.s32.totalorder %s53, %s54
      %p66 = scmp.eq.s32.totalorder %s23, 1
      %p67 = por %p65, %p66
      %p69 = scmp.ne.s32.totalorder %s54, %s68
      %p70 = scmp.eq.s32.totalorder %s23, 0
      %p71 = por %p69, %p70
      %s73 = sadd.s32 %s72, 1
      %p76 = scmp.eq.s32.totalorder %s17, 1
      %p77 = scmp.ne.s32.totalorder %s72, %s74
      %p78 = scmp.eq.s32.totalorder %s17, 0
      %p79 = por %p77, %p78
      %p80 = scmp.ne.s32.totalorder %s72, %s74
      %p81 = scmp.eq.s32.totalorder %s22, 1
      %p82 = por %p80, %p81
      %p83 = scmp.ne.s32.totalorder %s74, %s75
      %p84 = scmp.eq.s32.totalorder %s22, 0
      %p85 = por %p83, %p84
      %p86 = scmp.ne.s32.totalorder %s74, %s75
      %p87 = scmp.eq.s32.totalorder %s23, 1
      %p88 = por %p86, %p87
      %p90 = scmp.ne.s32.totalorder %s75, %s89
      %p91 = scmp.eq.s32.totalorder %s23, 0
      %p92 = por %p90, %p91
      %s94 = sadd.s32 %s93, 1
      %p97 = scmp.eq.s32.totalorder %s17, 1
      %p98 = scmp.ne.s32.totalorder %s93, %s95
      %p99 = scmp.eq.s32.totalorder %s17, 0
      %p100 = por %p98, %p99
      %p101 = scmp.ne.s32.totalorder %s93, %s95
      %p102 = scmp.eq.s32.totalorder %s22, 1
      %p103 = por %p101, %p102
      %p104 = scmp.ne.s32.totalorder %s95, %s96
      %p105 = scmp.eq.s32.totalorder %s22, 0
      %p106 = por %p104, %p105
      %p107 = scmp.ne.s32.totalorder %s95, %s96
      %p108 = scmp.eq.s32.totalorder %s23, 1
      %p109 = por %p107, %p108
      %p111 = scmp.ne.s32.totalorder %s96, %s110
      %p112 = scmp.eq.s32.totalorder %s23, 0
      %p113 = por %p111, %p112
      %s114 = ssub.s32 %s17, %s24
      %p115 = scmp.eq.s32.totalorder %s114, 0
      %s117 = sadd.s32 %s116, 1
      %s118 = scalar_select %p115, %s116, %s117
      %p121 = pneg %p115
      %p122 = scmp.eq.s32.totalorder %s17, 1
      %p123 = por %p121, %p122
      %p124 = scmp.ne.s32.totalorder %s116, %s119
      %p125 = scmp.eq.s32.totalorder %s17, 0
      %p126 = por %p124, %p125
      %p127 = scmp.ne.s32.totalorder %s116, %s119
      %p128 = scmp.eq.s32.totalorder %s22, 1
      %p129 = por %p127, %p128
      %p130 = scmp.ne.s32.totalorder %s119, %s120
      %p131 = scmp.eq.s32.totalorder %s22, 0
      %p132 = por %p130, %p131
      %p133 = scmp.ne.s32.totalorder %s119, %s120
      %p134 = scmp.eq.s32.totalorder %s23, 1
      %p135 = por %p133, %p134
      %p137 = scmp.ne.s32.totalorder %s120, %s136
      %p138 = scmp.eq.s32.totalorder %s23, 0
      %p139 = por %p137, %p138
      %p140 = scmp.le.s32.totalorder 1, %s17
      %p141 = scmp.lt.s32.totalorder %s17, 3
      %p142 = pnand %p140, %p141
      %p143 = pneg %p142
      // Predicated region
      $region9: #{tpu_custom_call.1} parent=5 // pred_check
        _
      $region10: #{tpu_custom_call.1} parent=5 // pred_check_branch
        %145 = sbr.rel (%p142) target = $region12
      $region11: #{tpu_custom_call.1} parent=5 // pred_region
        %s146 = ssub.s32 %s17, 1
        // Predicated region
        $region13: #{tpu_custom_call.1} parent=11 // pred_check
          %p147 = pneg %p64
        $region14: #{tpu_custom_call.1} parent=11 // pred_check_branch
          %149 = sbr.rel (%p147) target = $region16
        $region15: #{tpu_custom_call.1} parent=11 // pred_region
          _
        $region16: #{tpu_custom_call.1} parent=11 // pred_fallthru
          _
        // Predicated region
        $region17: #{tpu_custom_call.1} parent=11 // pred_check
          %p150 = pneg %p85
        $region18: #{tpu_custom_call.1} parent=11 // pred_check_branch
          %152 = sbr.rel (%p150) target = $region20
        $region19: #{tpu_custom_call.1} parent=11 // pred_region
          _
        $region20: #{tpu_custom_call.1} parent=11 // pred_fallthru
          _
        // Predicated region
        $region21: #{tpu_custom_call.1} parent=11 // pred_check
          %p153 = pneg %p106
        $region22: #{tpu_custom_call.1} parent=11 // pred_check_branch
          %155 = sbr.rel (%p153) target = $region24
        $region23: #{tpu_custom_call.1} parent=11 // pred_region
          _
        $region24: #{tpu_custom_call.1} parent=11 // pred_fallthru
          _
      $region12: #{tpu_custom_call.1} parent=5 // pred_fallthru
        _
      %p156 = scmp.lt.s32.totalorder %s17, 2
      // Predicated region
      $region25: #{tpu_custom_call.1} parent=5 // pred_check
        %p157 = pneg %p156
      $region26: #{tpu_custom_call.1} parent=5 // pred_check_branch
        %159 = sbr.rel (%p157) target = $region28
      $region27: #{tpu_custom_call.1} parent=5 // pred_region
        // Predicated region
        $region29: #{tpu_custom_call.1} parent=27 // pred_check
          %p160 = pneg %p37
        $region30: #{tpu_custom_call.1} parent=27 // pred_check_branch
          %162 = sbr.rel (%p160) target = $region32
        $region31: #{tpu_custom_call.1} parent=27 // pred_region
          %s163 = sand.u32 %s27, 1
          %s164 = scalar_lea.sflag [#allocation4], %s163
          %s165 = sand.u32 %s27, 1
          %s166 = smul.addr %s165, 256
          %s167 = scalar_lea.vmem [#allocation3], %s166
          %169 = vsyncadd %s164, 0
          %s170 = smul.addr %s17, 32
          %s171 = smul.addr %s170, 8
          %s172 = scalar_lea.hbm %s0, %s171
          %s173 = sshll.u32 %s172, 4
          %s174 = int_to_ptr.hbm [resolvable:$true] %s173
          %s175 = sshll.u32 %s167, 4
          %s176 = int_to_ptr.vmem [resolvable:$true] %s175
          %181 = dma.hbm_to_vmem [thread:$0]  %s174, 4096, %s176, %s164, 128, 128, 8
        $region32: #{tpu_custom_call.1} parent=27 // pred_fallthru
          _
      $region28: #{tpu_custom_call.1} parent=5 // pred_fallthru
        _
      %p182 = scmp.le.s32.totalorder 1, %s17
      %p183 = scmp.lt.s32.totalorder %s17, 3
      %p184 = pnand %p182, %p183
      %p185 = pneg %p184
      // Predicated region
      $region33: #{tpu_custom_call.1} parent=5 // pred_check
        _
      $region34: #{tpu_custom_call.1} parent=5 // pred_check_branch
        %187 = sbr.rel (%p184) target = $region36
      $region35: #{tpu_custom_call.1} parent=5 // pred_region
        %s188 = ssub.s32 %s17, 1
        %s189 = sand.u32 %s30, 1
        %s190 = scalar_lea.sflag [#allocation4], %s189
        %s191 = sand.u32 %s30, 1
        %s192 = smul.addr %s191, 256
        %s193 = scalar_lea.vmem [#allocation3], %s192
        // Predicated region
        $region37: #{tpu_custom_call.1} parent=35 // pred_check
          %p194 = pneg %p43
        $region38: #{tpu_custom_call.1} parent=35 // pred_check_branch
          %196 = sbr.rel (%p194) target = $region40
        $region39: #{tpu_custom_call.1} parent=35 // pred_region
          %198 = dma.done %s190, 4096
        $region40: #{tpu_custom_call.1} parent=35 // pred_fallthru
          _
        %s199 = sand.u32 %s30, 1
        %s200 = scalar_lea.sflag [#allocation4], %s199
        %s201 = sand.u32 %s30, 1
        %s202 = smul.addr %s201, 256
        %s203 = scalar_lea.vmem [#allocation3], %s202
        %p204 = pneg %p43
        %p205 = pneg %p40
        %p206 = pneg %p64
        %p207 = pneg %p61
        %p208 = pneg %p85
        %p209 = pneg %p82
        %p210 = pneg %p106
        %p211 = pneg %p103
        %p212 = pneg %p132
        %p213 = pneg %p129
        %s214 = sand.u32 %s119, 1
        %s215 = scalar_lea.sflag [#allocation5], %s214
        %s216 = sand.u32 %s119, 1
        %s217 = smul.addr %s216, 256
        %s218 = scalar_lea.vmem [#allocation6], %s217
        %v219 = vld [vmem:[%s193] sm:$0xff]
        %v220 = vld [vmem:[%s193 + $0x8] sm:$0xff]
        %v221 = vld [vmem:[%s193 + $0x10] sm:$0xff]
        %v222 = vld [vmem:[%s193 + $0x18] sm:$0xff]
        %v223 = vld [vmem:[%s193 + $0x20] sm:$0xff]
        %v224 = vld [vmem:[%s193 + $0x28] sm:$0xff]
        %v225 = vld [vmem:[%s193 + $0x30] sm:$0xff]
        %v226 = vld [vmem:[%s193 + $0x38] sm:$0xff]
        %v227 = vld [vmem:[%s193 + $0x40] sm:$0xff]
        %v228 = vld [vmem:[%s193 + $0x48] sm:$0xff]
        %v229 = vld [vmem:[%s193 + $0x50] sm:$0xff]
        %v230 = vld [vmem:[%s193 + $0x58] sm:$0xff]
        %v231 = vld [vmem:[%s193 + $0x60] sm:$0xff]
        %v232 = vld [vmem:[%s193 + $0x68] sm:$0xff]
        %v233 = vld [vmem:[%s193 + $0x70] sm:$0xff]
        %v234 = vld [vmem:[%s193 + $0x78] sm:$0xff]
        %v235 = vld [vmem:[%s193 + $0x80] sm:$0xff]
        %v236 = vld [vmem:[%s193 + $0x88] sm:$0xff]
        %v237 = vld [vmem:[%s193 + $0x90] sm:$0xff]
        %v238 = vld [vmem:[%s193 + $0x98] sm:$0xff]
        %v239 = vld [vmem:[%s193 + $0xa0] sm:$0xff]
        %v240 = vld [vmem:[%s193 + $0xa8] sm:$0xff]
        %v241 = vld [vmem:[%s193 + $0xb0] sm:$0xff]
        %v242 = vld [vmem:[%s193 + $0xb8] sm:$0xff]
        %v243 = vld [vmem:[%s193 + $0xc0] sm:$0xff]
        %v244 = vld [vmem:[%s193 + $0xc8] sm:$0xff]
        %v245 = vld [vmem:[%s193 + $0xd0] sm:$0xff]
        %v246 = vld [vmem:[%s193 + $0xd8] sm:$0xff]
        %v247 = vld [vmem:[%s193 + $0xe0] sm:$0xff]
        %v248 = vld [vmem:[%s193 + $0xe8] sm:$0xff]
        %v249 = vld [vmem:[%s193 + $0xf0] sm:$0xff]
        %v250 = vld [vmem:[%s193 + $0xf8] sm:$0xff]
        %251 = vadd.xlane.f32.xlu0 %v219
        %v252 = vpop.xlane.xlu0 %251
        %253 = vadd.xlane.f32.xlu0 %v220
        %v254 = vpop.xlane.xlu0 %253
        %255 = vadd.xlane.f32.xlu0 %v221
        %v256 = vpop.xlane.xlu0 %255
        %257 = vadd.xlane.f32.xlu0 %v222
        %v258 = vpop.xlane.xlu0 %257
        %259 = vadd.xlane.f32.xlu0 %v223
        %v260 = vpop.xlane.xlu0 %259
        %261 = vadd.xlane.f32.xlu0 %v224
        %v262 = vpop.xlane.xlu0 %261
        %263 = vadd.xlane.f32.xlu0 %v225
        %v264 = vpop.xlane.xlu0 %263
        %265 = vadd.xlane.f32.xlu0 %v226
        %v266 = vpop.xlane.xlu0 %265
        %267 = vadd.xlane.f32.xlu0 %v227
        %v268 = vpop.xlane.xlu0 %267
        %269 = vadd.xlane.f32.xlu0 %v228
        %v270 = vpop.xlane.xlu0 %269
        %271 = vadd.xlane.f32.xlu0 %v229
        %v272 = vpop.xlane.xlu0 %271
        %273 = vadd.xlane.f32.xlu0 %v230
        %v274 = vpop.xlane.xlu0 %273
        %275 = vadd.xlane.f32.xlu0 %v231
        %v276 = vpop.xlane.xlu0 %275
        %277 = vadd.xlane.f32.xlu0 %v232
        %v278 = vpop.xlane.xlu0 %277
        %279 = vadd.xlane.f32.xlu0 %v233
        %v280 = vpop.xlane.xlu0 %279
        %281 = vadd.xlane.f32.xlu0 %v234
        %v282 = vpop.xlane.xlu0 %281
        %283 = vadd.xlane.f32.xlu0 %v235
        %v284 = vpop.xlane.xlu0 %283
        %285 = vadd.xlane.f32.xlu0 %v236
        %v286 = vpop.xlane.xlu0 %285
        %287 = vadd.xlane.f32.xlu0 %v237
        %v288 = vpop.xlane.xlu0 %287
        %289 = vadd.xlane.f32.xlu0 %v238
        %v290 = vpop.xlane.xlu0 %289
        %291 = vadd.xlane.f32.xlu0 %v239
        %v292 = vpop.xlane.xlu0 %291
        %293 = vadd.xlane.f32.xlu0 %v240
        %v294 = vpop.xlane.xlu0 %293
        %295 = vadd.xlane.f32.xlu0 %v241
        %v296 = vpop.xlane.xlu0 %295
        %297 = vadd.xlane.f32.xlu0 %v242
        %v298 = vpop.xlane.xlu0 %297
        %299 = vadd.xlane.f32.xlu0 %v243
        %v300 = vpop.xlane.xlu0 %299
        %301 = vadd.xlane.f32.xlu0 %v244
        %v302 = vpop.xlane.xlu0 %301
        %303 = vadd.xlane.f32.xlu0 %v245
        %v304 = vpop.xlane.xlu0 %303
        %305 = vadd.xlane.f32.xlu0 %v246
        %v306 = vpop.xlane.xlu0 %305
        %307 = vadd.xlane.f32.xlu0 %v247
        %v308 = vpop.xlane.xlu0 %307
        %309 = vadd.xlane.f32.xlu0 %v248
        %v310 = vpop.xlane.xlu0 %309
        %311 = vadd.xlane.f32.xlu0 %v249
        %v312 = vpop.xlane.xlu0 %311
        %313 = vadd.xlane.f32.xlu0 %v250
        %v314 = vpop.xlane.xlu0 %313
        %v315 = vrcp.pop 128.0
        %v316 = vmul.f32 128.0, %v315
        %v317 = vsub.f32 1.0, %v316
        %v318 = vmul.f32 %v315, %v317
        %v319 = vadd.f32 %v315, %v318
        %vm320 = vweird.f32 %v315
        %v321 = vsel %vm320, %v315, %v319
        %v322 = vmul.f32 %v252, %v321
        %v323 = vmul.f32 %v254, %v321
        %v324 = vmul.f32 %v256, %v321
        %v325 = vmul.f32 %v258, %v321
        %v326 = vmul.f32 %v260, %v321
        %v327 = vmul.f32 %v262, %v321
        %v328 = vmul.f32 %v264, %v321
        %v329 = vmul.f32 %v266, %v321
        %v330 = vmul.f32 %v268, %v321
        %v331 = vmul.f32 %v270, %v321
        %v332 = vmul.f32 %v272, %v321
        %v333 = vmul.f32 %v274, %v321
        %v334 = vmul.f32 %v276, %v321
        %v335 = vmul.f32 %v278, %v321
        %v336 = vmul.f32 %v280, %v321
        %v337 = vmul.f32 %v282, %v321
        %v338 = vmul.f32 %v284, %v321
        %v339 = vmul.f32 %v286, %v321
        %v340 = vmul.f32 %v288, %v321
        %v341 = vmul.f32 %v290, %v321
        %v342 = vmul.f32 %v292, %v321
        %v343 = vmul.f32 %v294, %v321
        %v344 = vmul.f32 %v296, %v321
        %v345 = vmul.f32 %v298, %v321
        %v346 = vmul.f32 %v300, %v321
        %v347 = vmul.f32 %v302, %v321
        %v348 = vmul.f32 %v304, %v321
        %v349 = vmul.f32 %v306, %v321
        %v350 = vmul.f32 %v308, %v321
        %v351 = vmul.f32 %v310, %v321
        %v352 = vmul.f32 %v312, %v321
        %v353 = vmul.f32 %v314, %v321
        %354 = vmax.xlane.f32.xlu0 %v219
        %v355 = vpop.xlane.xlu0 %354
        %356 = vmax.xlane.f32.xlu0 %v220
        %v357 = vpop.xlane.xlu0 %356
        %358 = vmax.xlane.f32.xlu0 %v221
        %v359 = vpop.xlane.xlu0 %358
        %360 = vmax.xlane.f32.xlu0 %v222
        %v361 = vpop.xlane.xlu0 %360
        %362 = vmax.xlane.f32.xlu0 %v223
        %v363 = vpop.xlane.xlu0 %362
        %364 = vmax.xlane.f32.xlu0 %v224
        %v365 = vpop.xlane.xlu0 %364
        %366 = vmax.xlane.f32.xlu0 %v225
        %v367 = vpop.xlane.xlu0 %366
        %368 = vmax.xlane.f32.xlu0 %v226
        %v369 = vpop.xlane.xlu0 %368
        %370 = vmax.xlane.f32.xlu0 %v227
        %v371 = vpop.xlane.xlu0 %370
        %372 = vmax.xlane.f32.xlu0 %v228
        %v373 = vpop.xlane.xlu0 %372
        %374 = vmax.xlane.f32.xlu0 %v229
        %v375 = vpop.xlane.xlu0 %374
        %376 = vmax.xlane.f32.xlu0 %v230
        %v377 = vpop.xlane.xlu0 %376
        %378 = vmax.xlane.f32.xlu0 %v231
        %v379 = vpop.xlane.xlu0 %378
        %380 = vmax.xlane.f32.xlu0 %v232
        %v381 = vpop.xlane.xlu0 %380
        %382 = vmax.xlane.f32.xlu0 %v233
        %v383 = vpop.xlane.xlu0 %382
        %384 = vmax.xlane.f32.xlu0 %v234
        %v385 = vpop.xlane.xlu0 %384
        %386 = vmax.xlane.f32.xlu0 %v235
        %v387 = vpop.xlane.xlu0 %386
        %388 = vmax.xlane.f32.xlu0 %v236
        %v389 = vpop.xlane.xlu0 %388
        %390 = vmax.xlane.f32.xlu0 %v237
        %v391 = vpop.xlane.xlu0 %390
        %392 = vmax.xlane.f32.xlu0 %v238
        %v393 = vpop.xlane.xlu0 %392
        %394 = vmax.xlane.f32.xlu0 %v239
        %v395 = vpop.xlane.xlu0 %394
        %396 = vmax.xlane.f32.xlu0 %v240
        %v397 = vpop.xlane.xlu0 %396
        %398 = vmax.xlane.f32.xlu0 %v241
        %v399 = vpop.xlane.xlu0 %398
        %400 = vmax.xlane.f32.xlu0 %v242
        %v401 = vpop.xlane.xlu0 %400
        %402 = vmax.xlane.f32.xlu0 %v243
        %v403 = vpop.xlane.xlu0 %402
        %404 = vmax.xlane.f32.xlu0 %v244
        %v405 = vpop.xlane.xlu0 %404
        %406 = vmax.xlane.f32.xlu0 %v245
        %v407 = vpop.xlane.xlu0 %406
        %408 = vmax.xlane.f32.xlu0 %v246
        %v409 = vpop.xlane.xlu0 %408
        %410 = vmax.xlane.f32.xlu0 %v247
        %v411 = vpop.xlane.xlu0 %410
        %412 = vmax.xlane.f32.xlu0 %v248
        %v413 = vpop.xlane.xlu0 %412
        %414 = vmax.xlane.f32.xlu0 %v249
        %v415 = vpop.xlane.xlu0 %414
        %416 = vmax.xlane.f32.xlu0 %v250
        %v417 = vpop.xlane.xlu0 %416
        %v418 = vadd.f32 %v322, %v355
        %v419 = vadd.f32 %v323, %v357
        %v420 = vadd.f32 %v324, %v359
        %v421 = vadd.f32 %v325, %v361
        %v422 = vadd.f32 %v326, %v363
        %v423 = vadd.f32 %v327, %v365
        %v424 = vadd.f32 %v328, %v367
        %v425 = vadd.f32 %v329, %v369
        %v426 = vadd.f32 %v330, %v371
        %v427 = vadd.f32 %v331, %v373
        %v428 = vadd.f32 %v332, %v375
        %v429 = vadd.f32 %v333, %v377
        %v430 = vadd.f32 %v334, %v379
        %v431 = vadd.f32 %v335, %v381
        %v432 = vadd.f32 %v336, %v383
        %v433 = vadd.f32 %v337, %v385
        %v434 = vadd.f32 %v338, %v387
        %v435 = vadd.f32 %v339, %v389
        %v436 = vadd.f32 %v340, %v391
        %v437 = vadd.f32 %v341, %v393
        %v438 = vadd.f32 %v342, %v395
        %v439 = vadd.f32 %v343, %v397
        %v440 = vadd.f32 %v344, %v399
        %v441 = vadd.f32 %v345, %v401
        %v442 = vadd.f32 %v346, %v403
        %v443 = vadd.f32 %v347, %v405
        %v444 = vadd.f32 %v348, %v407
        %v445 = vadd.f32 %v349, %v409
        %v446 = vadd.f32 %v350, %v411
        %v447 = vadd.f32 %v351, %v413
        %v448 = vadd.f32 %v352, %v415
        %v449 = vadd.f32 %v353, %v417
        %v450 = vld [vmem:[%s1] sm:$0xff]
        %v451 = vld [vmem:[%s1 + $0x8] sm:$0xff]
        %v452 = vld [vmem:[%s1 + $0x10] sm:$0xff]
        %v453 = vld [vmem:[%s1 + $0x18] sm:$0xff]
        %v454 = vld [vmem:[%s1 + $0x20] sm:$0xff]
        %v455 = vld [vmem:[%s1 + $0x28] sm:$0xff]
        %v456 = vld [vmem:[%s1 + $0x30] sm:$0xff]
        %v457 = vld [vmem:[%s1 + $0x38] sm:$0xff]
        %v458 = vld [vmem:[%s1 + $0x40] sm:$0xff]
        %v459 = vld [vmem:[%s1 + $0x48] sm:$0xff]
        %v460 = vld [vmem:[%s1 + $0x50] sm:$0xff]
        %v461 = vld [vmem:[%s1 + $0x58] sm:$0xff]
        %v462 = vld [vmem:[%s1 + $0x60] sm:$0xff]
        %v463 = vld [vmem:[%s1 + $0x68] sm:$0xff]
        %v464 = vld [vmem:[%s1 + $0x70] sm:$0xff]
        %v465 = vld [vmem:[%s1 + $0x78] sm:$0xff]
        %v466 = vld [vmem:[%s1 + $0x80] sm:$0xff]
        %v467 = vld [vmem:[%s1 + $0x88] sm:$0xff]
        %v468 = vld [vmem:[%s1 + $0x90] sm:$0xff]
        %v469 = vld [vmem:[%s1 + $0x98] sm:$0xff]
        %v470 = vld [vmem:[%s1 + $0xa0] sm:$0xff]
        %v471 = vld [vmem:[%s1 + $0xa8] sm:$0xff]
        %v472 = vld [vmem:[%s1 + $0xb0] sm:$0xff]
        %v473 = vld [vmem:[%s1 + $0xb8] sm:$0xff]
        %v474 = vld [vmem:[%s1 + $0xc0] sm:$0xff]
        %v475 = vld [vmem:[%s1 + $0xc8] sm:$0xff]
        %v476 = vld [vmem:[%s1 + $0xd0] sm:$0xff]
        %v477 = vld [vmem:[%s1 + $0xd8] sm:$0xff]
        %v478 = vld [vmem:[%s1 + $0xe0] sm:$0xff]
        %v479 = vld [vmem:[%s1 + $0xe8] sm:$0xff]
        %v480 = vld [vmem:[%s1 + $0xf0] sm:$0xff]
        %v481 = vld [vmem:[%s1 + $0xf8] sm:$0xff]
        %v514 = vlaneseq
        %v515 = vand.u32 %v514, 127
        %v516 = vperm.slane %v418, %v515
        %v517 = vadd.s32 %v515, 4294967288
        %v518 = vperm.slane %v419, %v517
        %vm519 = vcmask 130112
        %v520 = vsel %vm519, %v518, %v516
        %v521 = vadd.s32 %v515, 4294967280
        %v522 = vperm.slane %v420, %v521
        %vm523 = vcmask 195712
        %v524 = vsel %vm523, %v522, %v520
        %v525 = vadd.s32 %v515, 4294967272
        %v526 = vperm.slane %v421, %v525
        %vm527 = vcmask 261312
        %v528 = vsel %vm527, %v526, %v524
        %v529 = vadd.s32 %v515, 4294967264
        %v530 = vperm.slane %v422, %v529
        %vm531 = vcmask 326912
        %v532 = vsel %vm531, %v530, %v528
        %v533 = vadd.s32 %v515, 4294967256
        %v534 = vperm.slane %v423, %v533
        %vm535 = vcmask 392512
        %v536 = vsel %vm535, %v534, %v532
        %v537 = vadd.s32 %v515, 4294967248
        %v538 = vperm.slane %v424, %v537
        %vm539 = vcmask 458112
        %v540 = vsel %vm539, %v538, %v536
        %v541 = vadd.s32 %v515, 4294967240
        %v542 = vperm.slane %v425, %v541
        %vm543 = vcmask 523712
        %v544 = vsel %vm543, %v542, %v540
        %v545 = vadd.s32 %v515, 4294967232
        %v546 = vperm.slane %v426, %v545
        %vm547 = vcmask 589312
        %v548 = vsel %vm547, %v546, %v544
        %v549 = vadd.s32 %v515, 4294967224
        %v550 = vperm.slane %v427, %v549
        %vm551 = vcmask 654912
        %v552 = vsel %vm551, %v550, %v548
        %v553 = vadd.s32 %v515, 4294967216
        %v554 = vperm.slane %v428, %v553
        %vm555 = vcmask 720512
        %v556 = vsel %vm555, %v554, %v552
        %v557 = vadd.s32 %v515, 4294967208
        %v558 = vperm.slane %v429, %v557
        %vm559 = vcmask 786112
        %v560 = vsel %vm559, %v558, %v556
        %v561 = vadd.s32 %v515, 4294967200
        %v562 = vperm.slane %v430, %v561
        %vm563 = vcmask 851712
        %v564 = vsel %vm563, %v562, %v560
        %v565 = vadd.s32 %v515, 4294967192
        %v566 = vperm.slane %v431, %v565
        %vm567 = vcmask 917312
        %v568 = vsel %vm567, %v566, %v564
        %v569 = vadd.s32 %v515, 4294967184
        %v570 = vperm.slane %v432, %v569
        %vm571 = vcmask 982912
        %v572 = vsel %vm571, %v570, %v568
        %v573 = vadd.s32 %v515, 4294967176
        %v574 = vperm.slane %v433, %v573
        %vm575 = vcmask 1048512
        %v576 = vsel %vm575, %v574, %v572
        %v577 = vperm.slane %v434, %v515
        %v578 = vperm.slane %v435, %v517
        %v579 = vsel %vm519, %v578, %v577
        %v580 = vperm.slane %v436, %v521
        %v581 = vsel %vm523, %v580, %v579
        %v582 = vperm.slane %v437, %v525
        %v583 = vsel %vm527, %v582, %v581
        %v584 = vperm.slane %v438, %v529
        %v585 = vsel %vm531, %v584, %v583
        %v586 = vperm.slane %v439, %v533
        %v587 = vsel %vm535, %v586, %v585
        %v588 = vperm.slane %v440, %v537
        %v589 = vsel %vm539, %v588, %v587
        %v590 = vperm.slane %v441, %v541
        %v591 = vsel %vm543, %v590, %v589
        %v592 = vperm.slane %v442, %v545
        %v593 = vsel %vm547, %v592, %v591
        %v594 = vperm.slane %v443, %v549
        %v595 = vsel %vm551, %v594, %v593
        %v596 = vperm.slane %v444, %v553
        %v597 = vsel %vm555, %v596, %v595
        %v598 = vperm.slane %v445, %v557
        %v599 = vsel %vm559, %v598, %v597
        %v600 = vperm.slane %v446, %v561
        %v601 = vsel %vm563, %v600, %v599
        %v602 = vperm.slane %v447, %v565
        %v603 = vsel %vm567, %v602, %v601
        %v604 = vperm.slane %v448, %v569
        %v605 = vsel %vm571, %v604, %v603
        %v606 = vperm.slane %v449, %v573
        %v607 = vsel %vm575, %v606, %v605
        %610 = vmatpush.msra.mxu0 %v465
        %611 = vmatpush.msra.mxu0 %v464
        %612 = vmatpush.msra.mxu0 %v463
        %613 = vmatpush.msra.mxu0 %v462
        %614 = vmatpush.msra.mxu0 %v461
        %615 = vmatpush.msra.mxu0 %v460
        %616 = vmatpush.msra.mxu0 %v459
        %617 = vmatpush.msra.mxu0 %v458
        %618 = vmatpush.msra.mxu0 %v457
        %619 = vmatpush.msra.mxu0 %v456
        %620 = vmatpush.msra.mxu0 %v455
        %621 = vmatpush.msra.mxu0 %v454
        %622 = vmatpush.msra.mxu0 %v453
        %623 = vmatpush.msra.mxu0 %v452
        %624 = vmatpush.msra.mxu0 %v451
        %625 = vmatpush.msra.mxu0 %v450
        %626 = vmatmul.f32.gmra.mxu0 %v576
        %v627 = vpop.f32.mrf.mxu0
        %v628 = vadd.f32 0.0, %v627
        %629 = vdwg.mxu0
        %630 = vmatpush.msra.mxu0 %v481
        %631 = vmatpush.msra.mxu0 %v480
        %632 = vmatpush.msra.mxu0 %v479
        %633 = vmatpush.msra.mxu0 %v478
        %634 = vmatpush.msra.mxu0 %v477
        %635 = vmatpush.msra.mxu0 %v476
        %636 = vmatpush.msra.mxu0 %v475
        %637 = vmatpush.msra.mxu0 %v474
        %638 = vmatpush.msra.mxu0 %v473
        %639 = vmatpush.msra.mxu0 %v472
        %640 = vmatpush.msra.mxu0 %v471
        %641 = vmatpush.msra.mxu0 %v470
        %642 = vmatpush.msra.mxu0 %v469
        %643 = vmatpush.msra.mxu0 %v468
        %644 = vmatpush.msra.mxu0 %v467
        %645 = vmatpush.msra.mxu0 %v466
        %646 = vmatmul.f32.gmra.mxu0 %v607
        %v647 = vpop.f32.mrf.mxu0
        %v648 = vadd.f32 %v628, %v647
        %649 = vdwg.mxu0
        %v650 = vmax.f32 %v648, 0.0
        %v651 = vld [vmem:[%s2] sm:$0xff]
        %v652 = vld [vmem:[%s2 + $0x8] sm:$0xff]
        %v653 = vld [vmem:[%s2 + $0x10] sm:$0xff]
        %v654 = vld [vmem:[%s2 + $0x18] sm:$0xff]
        %vm655 = vcmask 130048
        %v657 = vsel %vm655, %v650, 0
        %659 = vmatpush.msra.mxu0 0.0
        %660 = vmatpush.msra.mxu0 0.0
        %661 = vmatpush.msra.mxu0 0.0
        %662 = vmatpush.msra.mxu0 0.0
        %663 = vmatpush.msra.mxu0 0.0
        %664 = vmatpush.msra.mxu0 0.0
        %665 = vmatpush.msra.mxu0 0.0
        %666 = vmatpush.msra.mxu0 0.0
        %667 = vmatpush.msra.mxu0 0.0
        %668 = vmatpush.msra.mxu0 0.0
        %669 = vmatpush.msra.mxu0 0.0
        %670 = vmatpush.msra.mxu0 0.0
        %671 = vmatpush.msra.mxu0 0.0
        %672 = vmatpush.msra.mxu0 0.0
        %673 = vmatpush.msra.mxu0 %v653
        %674 = vmatpush.msra.mxu0 %v651
        %675 = vmatmul.f32.gmra.mxu0 %v657
        %v676 = vpop.f32.mrf.mxu0
        %v677 = vadd.f32 0.0, %v676
        %678 = vdwg.mxu0
        %679 = vmatpush.msra.mxu0 0.0
        %680 = vmatpush.msra.mxu0 0.0
        %681 = vmatpush.msra.mxu0 0.0
        %682 = vmatpush.msra.mxu0 0.0
        %683 = vmatpush.msra.mxu0 0.0
        %684 = vmatpush.msra.mxu0 0.0
        %685 = vmatpush.msra.mxu0 0.0
        %686 = vmatpush.msra.mxu0 0.0
        %687 = vmatpush.msra.mxu0 0.0
        %688 = vmatpush.msra.mxu0 0.0
        %689 = vmatpush.msra.mxu0 0.0
        %690 = vmatpush.msra.mxu0 0.0
        %691 = vmatpush.msra.mxu0 0.0
        %692 = vmatpush.msra.mxu0 0.0
        %693 = vmatpush.msra.mxu0 %v654
        %694 = vmatpush.msra.mxu0 %v652
        %695 = vmatmul.f32.gmra.mxu0 %v657
        %v696 = vpop.f32.mrf.mxu0
        %v697 = vadd.f32 0.0, %v696
        %698 = vdwg.mxu0
        %v699 = vxor.u32 %v677, 2147483648
        %v700 = vxor.u32 %v697, 2147483648
        %v701 = vmul.f32 %v699, 1.442695
        %v702 = vpow.pop %v701
        %v703 = vmul.f32 %v700, 1.442695
        %v704 = vpow.pop %v703
        %v705 = vadd.f32 %v702, 1.0
        %v706 = vadd.f32 %v704, 1.0
        %v707 = vrcp.pop %v705
        %v708 = vmul.f32 %v705, %v707
        %v709 = vsub.f32 1.0, %v708
        %v710 = vmul.f32 %v707, %v709
        %v711 = vadd.f32 %v707, %v710
        %vm712 = vweird.f32 %v705
        %vm713 = vweird.f32 %v707
        %vm714 = vmor %vm712, %vm713
        %v715 = vsel %vm714, %v707, %v711
        %v716 = vand.u32 2147483647, %v705
        %vm717 = vcmp.eq.f32.partialorder %v716, 8.507059e+37
        %v718 = vand.u32 %v705, 2147483648
        %v719 = vor.u32 1.1754944e-38, %v718
        %v720 = vsel %vm717, %v719, %v715
        %v721 = vmul.f32 1.0, %v720
        %v722 = vrcp.pop %v706
        %v723 = vmul.f32 %v706, %v722
        %v724 = vsub.f32 1.0, %v723
        %v725 = vmul.f32 %v722, %v724
        %v726 = vadd.f32 %v722, %v725
        %vm727 = vweird.f32 %v706
        %vm728 = vweird.f32 %v722
        %vm729 = vmor %vm727, %vm728
        %v730 = vsel %vm729, %v722, %v726
        %v731 = vand.u32 2147483647, %v706
        %vm732 = vcmp.eq.f32.partialorder %v731, 8.507059e+37
        %v733 = vand.u32 %v706, 2147483648
        %v734 = vor.u32 1.1754944e-38, %v733
        %v735 = vsel %vm732, %v734, %v730
        %v736 = vmul.f32 1.0, %v735
        %s737 = sld [smem:[#allocation2]]
        %v738 = vstv %s737
        %v739 = vmul.f32 %v721, %v738
        %v740 = vmul.f32 %v736, %v738
        %v741 = vperm.slane %v739, 0
        %v742 = vlaneseq
        %v743 = vshrl.u32 %v742, 7
        %745 = vset.pattern.permute.xlu0 %v743
        %746 = vperm.xlu0 %745, %v741
        %v747 = vpop.permute.xlu0 %746
        %v748 = vlaneseq
        %v749 = vshrl.u32 %v748, 7
        %v750 = vadd.s32 %v749, 8
        %751 = vset.pattern.permute.xlu0 %v750
        %752 = vperm.xlu0 %751, %v741
        %v753 = vpop.permute.xlu0 %752
        %v754 = vlaneseq
        %v755 = vshrl.u32 %v754, 7
        %v756 = vadd.s32 %v755, 16
        %757 = vset.pattern.permute.xlu0 %v756
        %758 = vperm.xlu0 %757, %v741
        %v759 = vpop.permute.xlu0 %758
        %v760 = vlaneseq
        %v761 = vshrl.u32 %v760, 7
        %v762 = vadd.s32 %v761, 24
        %763 = vset.pattern.permute.xlu0 %v762
        %764 = vperm.xlu0 %763, %v741
        %v765 = vpop.permute.xlu0 %764
        %v766 = vlaneseq
        %v767 = vshrl.u32 %v766, 7
        %v768 = vadd.s32 %v767, 32
        %769 = vset.pattern.permute.xlu0 %v768
        %770 = vperm.xlu0 %769, %v741
        %v771 = vpop.permute.xlu0 %770
        %v772 = vlaneseq
        %v773 = vshrl.u32 %v772, 7
        %v774 = vadd.s32 %v773, 40
        %775 = vset.pattern.permute.xlu0 %v774
        %776 = vperm.xlu0 %775, %v741
        %v777 = vpop.permute.xlu0 %776
        %v778 = vlaneseq
        %v779 = vshrl.u32 %v778, 7
        %v780 = vadd.s32 %v779, 48
        %781 = vset.pattern.permute.xlu0 %v780
        %782 = vperm.xlu0 %781, %v741
        %v783 = vpop.permute.xlu0 %782
        %v784 = vlaneseq
        %v785 = vshrl.u32 %v784, 7
        %v786 = vadd.s32 %v785, 56
        %787 = vset.pattern.permute.xlu0 %v786
        %788 = vperm.xlu0 %787, %v741
        %v789 = vpop.permute.xlu0 %788
        %v790 = vlaneseq
        %v791 = vshrl.u32 %v790, 7
        %v792 = vadd.s32 %v791, 64
        %793 = vset.pattern.permute.xlu0 %v792
        %794 = vperm.xlu0 %793, %v741
        %v795 = vpop.permute.xlu0 %794
        %v796 = vlaneseq
        %v797 = vshrl.u32 %v796, 7
        %v798 = vadd.s32 %v797, 72
        %799 = vset.pattern.permute.xlu0 %v798
        %800 = vperm.xlu0 %799, %v741
        %v801 = vpop.permute.xlu0 %800
        %v802 = vlaneseq
        %v803 = vshrl.u32 %v802, 7
        %v804 = vadd.s32 %v803, 80
        %805 = vset.pattern.permute.xlu0 %v804
        %806 = vperm.xlu0 %805, %v741
        %v807 = vpop.permute.xlu0 %806
        %v808 = vlaneseq
        %v809 = vshrl.u32 %v808, 7
        %v810 = vadd.s32 %v809, 88
        %811 = vset.pattern.permute.xlu0 %v810
        %812 = vperm.xlu0 %811, %v741
        %v813 = vpop.permute.xlu0 %812
        %v814 = vlaneseq
        %v815 = vshrl.u32 %v814, 7
        %v816 = vadd.s32 %v815, 96
        %817 = vset.pattern.permute.xlu0 %v816
        %818 = vperm.xlu0 %817, %v741
        %v819 = vpop.permute.xlu0 %818
        %v820 = vlaneseq
        %v821 = vshrl.u32 %v820, 7
        %v822 = vadd.s32 %v821, 104
        %823 = vset.pattern.permute.xlu0 %v822
        %824 = vperm.xlu0 %823, %v741
        %v825 = vpop.permute.xlu0 %824
        %v826 = vlaneseq
        %v827 = vshrl.u32 %v826, 7
        %v828 = vadd.s32 %v827, 112
        %829 = vset.pattern.permute.xlu0 %v828
        %830 = vperm.xlu0 %829, %v741
        %v831 = vpop.permute.xlu0 %830
        %v832 = vlaneseq
        %v833 = vshrl.u32 %v832, 7
        %v834 = vadd.s32 %v833, 120
        %835 = vset.pattern.permute.xlu0 %v834
        %836 = vperm.xlu0 %835, %v741
        %v837 = vpop.permute.xlu0 %836
        %v838 = vperm.slane %v740, 0
        %v839 = vlaneseq
        %v840 = vshrl.u32 %v839, 7
        %842 = vset.pattern.permute.xlu0 %v840
        %843 = vperm.xlu0 %842, %v838
        %v844 = vpop.permute.xlu0 %843
        %v845 = vlaneseq
        %v846 = vshrl.u32 %v845, 7
        %v847 = vadd.s32 %v846, 8
        %848 = vset.pattern.permute.xlu0 %v847
        %849 = vperm.xlu0 %848, %v838
        %v850 = vpop.permute.xlu0 %849
        %v851 = vlaneseq
        %v852 = vshrl.u32 %v851, 7
        %v853 = vadd.s32 %v852, 16
        %854 = vset.pattern.permute.xlu0 %v853
        %855 = vperm.xlu0 %854, %v838
        %v856 = vpop.permute.xlu0 %855
        %v857 = vlaneseq
        %v858 = vshrl.u32 %v857, 7
        %v859 = vadd.s32 %v858, 24
        %860 = vset.pattern.permute.xlu0 %v859
        %861 = vperm.xlu0 %860, %v838
        %v862 = vpop.permute.xlu0 %861
        %v863 = vlaneseq
        %v864 = vshrl.u32 %v863, 7
        %v865 = vadd.s32 %v864, 32
        %866 = vset.pattern.permute.xlu0 %v865
        %867 = vperm.xlu0 %866, %v838
        %v868 = vpop.permute.xlu0 %867
        %v869 = vlaneseq
        %v870 = vshrl.u32 %v869, 7
        %v871 = vadd.s32 %v870, 40
        %872 = vset.pattern.permute.xlu0 %v871
        %873 = vperm.xlu0 %872, %v838
        %v874 = vpop.permute.xlu0 %873
        %v875 = vlaneseq
        %v876 = vshrl.u32 %v875, 7
        %v877 = vadd.s32 %v876, 48
        %878 = vset.pattern.permute.xlu0 %v877
        %879 = vperm.xlu0 %878, %v838
        %v880 = vpop.permute.xlu0 %879
        %v881 = vlaneseq
        %v882 = vshrl.u32 %v881, 7
        %v883 = vadd.s32 %v882, 56
        %884 = vset.pattern.permute.xlu0 %v883
        %885 = vperm.xlu0 %884, %v838
        %v886 = vpop.permute.xlu0 %885
        %v887 = vlaneseq
        %v888 = vshrl.u32 %v887, 7
        %v889 = vadd.s32 %v888, 64
        %890 = vset.pattern.permute.xlu0 %v889
        %891 = vperm.xlu0 %890, %v838
        %v892 = vpop.permute.xlu0 %891
        %v893 = vlaneseq
        %v894 = vshrl.u32 %v893, 7
        %v895 = vadd.s32 %v894, 72
        %896 = vset.pattern.permute.xlu0 %v895
        %897 = vperm.xlu0 %896, %v838
        %v898 = vpop.permute.xlu0 %897
        %v899 = vlaneseq
        %v900 = vshrl.u32 %v899, 7
        %v901 = vadd.s32 %v900, 80
        %902 = vset.pattern.permute.xlu0 %v901
        %903 = vperm.xlu0 %902, %v838
        %v904 = vpop.permute.xlu0 %903
        %v905 = vlaneseq
        %v906 = vshrl.u32 %v905, 7
        %v907 = vadd.s32 %v906, 88
        %908 = vset.pattern.permute.xlu0 %v907
        %909 = vperm.xlu0 %908, %v838
        %v910 = vpop.permute.xlu0 %909
        %v911 = vlaneseq
        %v912 = vshrl.u32 %v911, 7
        %v913 = vadd.s32 %v912, 96
        %914 = vset.pattern.permute.xlu0 %v913
        %915 = vperm.xlu0 %914, %v838
        %v916 = vpop.permute.xlu0 %915
        %v917 = vlaneseq
        %v918 = vshrl.u32 %v917, 7
        %v919 = vadd.s32 %v918, 104
        %920 = vset.pattern.permute.xlu0 %v919
        %921 = vperm.xlu0 %920, %v838
        %v922 = vpop.permute.xlu0 %921
        %v923 = vlaneseq
        %v924 = vshrl.u32 %v923, 7
        %v925 = vadd.s32 %v924, 112
        %926 = vset.pattern.permute.xlu0 %v925
        %927 = vperm.xlu0 %926, %v838
        %v928 = vpop.permute.xlu0 %927
        %v929 = vlaneseq
        %v930 = vshrl.u32 %v929, 7
        %v931 = vadd.s32 %v930, 120
        %932 = vset.pattern.permute.xlu0 %v931
        %933 = vperm.xlu0 %932, %v838
        %v934 = vpop.permute.xlu0 %933
        %v935 = vmul.f32 %v219, %v747
        %v936 = vmul.f32 %v220, %v753
        %v937 = vmul.f32 %v221, %v759
        %v938 = vmul.f32 %v222, %v765
        %v939 = vmul.f32 %v223, %v771
        %v940 = vmul.f32 %v224, %v777
        %v941 = vmul.f32 %v225, %v783
        %v942 = vmul.f32 %v226, %v789
        %v943 = vmul.f32 %v227, %v795
        %v944 = vmul.f32 %v228, %v801
        %v945 = vmul.f32 %v229, %v807
        %v946 = vmul.f32 %v230, %v813
        %v947 = vmul.f32 %v231, %v819
        %v948 = vmul.f32 %v232, %v825
        %v949 = vmul.f32 %v233, %v831
        %v950 = vmul.f32 %v234, %v837
        %v951 = vmul.f32 %v235, %v844
        %v952 = vmul.f32 %v236, %v850
        %v953 = vmul.f32 %v237, %v856
        %v954 = vmul.f32 %v238, %v862
        %v955 = vmul.f32 %v239, %v868
        %v956 = vmul.f32 %v240, %v874
        %v957 = vmul.f32 %v241, %v880
        %v958 = vmul.f32 %v242, %v886
        %v959 = vmul.f32 %v243, %v892
        %v960 = vmul.f32 %v244, %v898
        %v961 = vmul.f32 %v245, %v904
        %v962 = vmul.f32 %v246, %v910
        %v963 = vmul.f32 %v247, %v916
        %v964 = vmul.f32 %v248, %v922
        %v965 = vmul.f32 %v249, %v928
        %v966 = vmul.f32 %v250, %v934
        %967 = vst [vmem:[%s218] sm:$0xff] %v935
        %968 = vst [vmem:[%s218 + $0x8] sm:$0xff] %v936
        %969 = vst [vmem:[%s218 + $0x10] sm:$0xff] %v937
        %970 = vst [vmem:[%s218 + $0x18] sm:$0xff] %v938
        %971 = vst [vmem:[%s218 + $0x20] sm:$0xff] %v939
        %972 = vst [vmem:[%s218 + $0x28] sm:$0xff] %v940
        %973 = vst [vmem:[%s218 + $0x30] sm:$0xff] %v941
        %974 = vst [vmem:[%s218 + $0x38] sm:$0xff] %v942
        %975 = vst [vmem:[%s218 + $0x40] sm:$0xff] %v943
        %976 = vst [vmem:[%s218 + $0x48] sm:$0xff] %v944
        %977 = vst [vmem:[%s218 + $0x50] sm:$0xff] %v945
        %978 = vst [vmem:[%s218 + $0x58] sm:$0xff] %v946
        %979 = vst [vmem:[%s218 + $0x60] sm:$0xff] %v947
        %980 = vst [vmem:[%s218 + $0x68] sm:$0xff] %v948
        %981 = vst [vmem:[%s218 + $0x70] sm:$0xff] %v949
        %982 = vst [vmem:[%s218 + $0x78] sm:$0xff] %v950
        %983 = vst [vmem:[%s218 + $0x80] sm:$0xff] %v951
        %984 = vst [vmem:[%s218 + $0x88] sm:$0xff] %v952
        %985 = vst [vmem:[%s218 + $0x90] sm:$0xff] %v953
        %986 = vst [vmem:[%s218 + $0x98] sm:$0xff] %v954
        %987 = vst [vmem:[%s218 + $0xa0] sm:$0xff] %v955
        %988 = vst [vmem:[%s218 + $0xa8] sm:$0xff] %v956
        %989 = vst [vmem:[%s218 + $0xb0] sm:$0xff] %v957
        %990 = vst [vmem:[%s218 + $0xb8] sm:$0xff] %v958
        %991 = vst [vmem:[%s218 + $0xc0] sm:$0xff] %v959
        %992 = vst [vmem:[%s218 + $0xc8] sm:$0xff] %v960
        %993 = vst [vmem:[%s218 + $0xd0] sm:$0xff] %v961
        %994 = vst [vmem:[%s218 + $0xd8] sm:$0xff] %v962
        %995 = vst [vmem:[%s218 + $0xe0] sm:$0xff] %v963
        %996 = vst [vmem:[%s218 + $0xe8] sm:$0xff] %v964
        %997 = vst [vmem:[%s218 + $0xf0] sm:$0xff] %v965
        %998 = vst [vmem:[%s218 + $0xf8] sm:$0xff] %v966
        %s999 = sand.u32 %s119, 1
        %s1000 = scalar_lea.sflag [#allocation5], %s999
        %s1001 = sand.u32 %s119, 1
        %s1002 = smul.addr %s1001, 256
        %s1003 = scalar_lea.vmem [#allocation6], %s1002
        // Predicated region
        $region41: #{tpu_custom_call.1} parent=35 // pred_check
          %p1004 = pneg %p129
        $region42: #{tpu_custom_call.1} parent=35 // pred_check_branch
          %1006 = sbr.rel (%p1004) target = $region44
        $region43: #{tpu_custom_call.1} parent=35 // pred_region
          %1008 = vsyncadd %s1000, 0
          %s1009 = smul.addr %s22, 32
          %s1010 = smul.addr %s1009, 8
          %s1011 = scalar_lea.hbm %s4, %s1010
          %s1012 = sshll.u32 %s1003, 4
          %s1013 = int_to_ptr.vmem [resolvable:$true] %s1012
          %s1014 = sshll.u32 %s1011, 4
          %s1015 = int_to_ptr.hbm [resolvable:$true] %s1014
          %1020 = dma.vmem_to_hbm [thread:$0]  %s1013, 4096, %s1015, %s1000, 128, 128, 8
        $region44: #{tpu_custom_call.1} parent=35 // pred_fallthru
          _
      $region36: #{tpu_custom_call.1} parent=5 // pred_fallthru
        _
      %p1021 = scmp.le.s32.totalorder 2, %s17
      // Predicated region
      $region45: #{tpu_custom_call.1} parent=5 // pred_check
        %p1022 = pneg %p1021
      $region46: #{tpu_custom_call.1} parent=5 // pred_check_branch
        %1024 = sbr.rel (%p1022) target = $region48
      $region47: #{tpu_custom_call.1} parent=5 // pred_region
        %s1025 = ssub.s32 %s17, 2
        // Predicated region
        $region49: #{tpu_custom_call.1} parent=47 // pred_check
          %p1026 = pneg %p135
        $region50: #{tpu_custom_call.1} parent=47 // pred_check_branch
          %1028 = sbr.rel (%p1026) target = $region52
        $region51: #{tpu_custom_call.1} parent=47 // pred_region
          %s1029 = sand.u32 %s120, 1
          %s1030 = scalar_lea.sflag [#allocation5], %s1029
          %s1031 = sand.u32 %s120, 1
          %s1032 = smul.addr %s1031, 256
          %s1033 = scalar_lea.vmem [#allocation6], %s1032
          %1035 = dma.done %s1030, 4096
        $region52: #{tpu_custom_call.1} parent=47 // pred_fallthru
          _
      $region48: #{tpu_custom_call.1} parent=5 // pred_fallthru
        _
    $region6: #{tpu_custom_call.1} parent=1 // loop_footer
      %s21 = sadd.s32 1, %s17
    $region7: #{tpu_custom_call.1} parent=1 // loop_footer_branch
      %16 = sbr.rel target = $region3
    $region8: #{tpu_custom_call.1} parent=1 // loop_exit
      _
    %1036 = vsyncpa [#allocation4], 1
    %s1037 = scalar_lea.sflag [#allocation4], 1
    %1038 = vsyncpa %s1037, 1
    %1039 = vsyncpa [#allocation5], 1
    %s1040 = scalar_lea.sflag [#allocation5], 1
    %1041 = vsyncpa %s1040, 1

</llo_original>
